<compile_context>
chip_gen: v6e
topology: v6e:2x2x1
jax: 0.10.0
libtpu: 0.0.40
codegen_flags: <defaults>
</compile_context>

<pallas_src>
import jax
import jax.numpy as jnp
from jax.experimental import pallas as pl
from jax.experimental.pallas import tpu as pltpu


# ----------------------------------------------------------------------------
# Helpers
# ----------------------------------------------------------------------------
def _round_up(x: int, m: int) -> int:
    return ((x + m - 1) // m) * m


_FEATURES = {}


def _supports(name: str) -> bool:
    """Probe optional Pallas/Mosaic features once with a tiny eager kernel."""
    if name in _FEATURES:
        return _FEATURES[name]
    ok = False
    try:
        if name == "buffered_single":
            def _k(w_ref, o_ref):
                o_ref[...] = w_ref[...] + 1.0
            out = pl.pallas_call(
                _k,
                out_shape=jax.ShapeDtypeStruct((8, 128), jnp.float32),
                grid=(2,),
                in_specs=[pl.BlockSpec((8, 128), lambda i: (0, 0),
                                       pipeline_mode=pl.Buffered(1))],
                out_specs=pl.BlockSpec((8, 128), lambda i: (0, 0)),
            )(jnp.zeros((8, 128), jnp.float32))
        elif name == "erf":
            def _k(x_ref, o_ref):
                o_ref[...] = jax.lax.erf(x_ref[...])
            out = pl.pallas_call(
                _k, out_shape=jax.ShapeDtypeStruct((8, 128), jnp.float32),
            )(jnp.zeros((8, 128), jnp.float32))
        else:
            raise ValueError(name)
        jax.block_until_ready(out)
        ok = True
    except Exception:
        ok = False
    _FEATURES[name] = ok
    return ok


def _gelu(x):
    # nn.GELU() default == exact (erf) GELU; fall back to the tanh approximation only
    # if erf does not lower on this Pallas/Mosaic build (delta ~1e-3, inside tol).
    return jax.nn.gelu(x, approximate=not _FEATURES.get("erf", True))


def _const_spec(arr):
    """Full-array block with a constant index map (stays VMEM-resident).  Constant
    blocks never change, so they are single-buffered when supported."""
    n = arr.ndim
    idx = lambda *_args, _n=n: (0,) * _n
    if _supports("buffered_single"):
        return pl.BlockSpec(arr.shape, idx, pipeline_mode=pl.Buffered(1))
    return pl.BlockSpec(arr.shape, idx)


_VMEM_CAP = None


def _vmem_cap() -> int:
    global _VMEM_CAP
    if _VMEM_CAP is None:
        try:
            _VMEM_CAP = int(pltpu.get_tpu_info().vmem_capacity_bytes)
        except Exception:
            _VMEM_CAP = 128 << 20            # v5e/v6e; v7x reports 64 MiB itself
    return _VMEM_CAP


def _vmem_budget() -> int:
    cap = _vmem_cap()
    return min(cap - (16 << 20), int(cap * 0.8))


def _compiler_params(semantics, const_arrays=(), stream_bytes=0, scratch_bytes=0):
    """Generation-aware vmem limit computed from per-step block residency."""
    wmult = 1 if _supports("buffered_single") else 2
    need = wmult * sum(int(a.size) * a.dtype.itemsize for a in const_arrays)
    need += 2 * int(stream_bytes) + int(scratch_bytes) + (4 << 20)
    limit = max(32 << 20, min(need, _vmem_budget()))
    return pltpu.CompilerParams(dimension_semantics=tuple(semantics),
                                vmem_limit_bytes=int(limit))


def _k_tile(dim: int) -> int:
    """Contraction-dim tile for weight streaming (full dim if small / indivisible)."""
    for t in (512, 256, 128):
        if dim % t == 0 and dim >= 2 * t:
            return t
    return dim


def _head_batch_tile(B: int) -> int:
    """Batch tile for the head kernels: multiple of 8, and >=2 parallel grid steps when
    there are enough rows (v7x shards parallel grid axes over its 2 TensorCores)."""
    b8 = _round_up(max(B, 1), 8)
    return min(128, _round_up(max(b8 // 2, 8), 8))


def _pool_batch_tile(B: int, S: int, D: int, use_map: bool) -> int:
    """Examples per grid step for the pooling kernels (amortizes per-step overhead,
    raises MXU occupancy) such that per-step blocks fit the VMEM budget."""
    budget = _vmem_budget()
    wbytes = (2 * D * D * 2) if use_map else 0            # resident Wk + Wv (bf16)

    def fits(t):
        x_blocks = 2 * t * S * D * 4                      # double-buffered f32 input
        inter = t * S * D * (12 if use_map else 4)        # x bf16 + k/v/p_full f32
        outb = 2 * t * D * 4
        return wbytes + x_blocks + inter + outb + (4 << 20) <= budget

    for t in range(min(8, B), 0, -1):
        if B % t == 0 and ((t * S) % 8 == 0 or t == B):
            if fits(t) or t == 1:
                return t
    return B                                              # whole batch as one block


# ----------------------------------------------------------------------------
# Kernels
# ----------------------------------------------------------------------------
def _map_pool_kernel(x_ref, wk_ref, wv_ref, bk_ref, bv_ref, qbd_ref, exp_ref, o_ref):
    """MAP cross-attention pooling for TBp examples per grid step.

    x_ref : (TBp*S, D) f32 sequence-flattened activations (cast to bf16 in-kernel).
    o_ref : (1, TBp, D) f32 pooled attention output (pre out-projection).
    """
    tbp = o_ref.shape[1]
    seq = x_ref.shape[0] // tbp
    x = x_ref[...].astype(jnp.bfloat16)
    # Batched key/value projections: M = TBp*S rows on the MXU, f32 accumulation.
    k = jnp.dot(x, wk_ref[...], preferred_element_type=jnp.float32) + bk_ref[...]
    v = jnp.dot(x, wv_ref[...], preferred_element_type=jnp.float32) + bv_ref[...]
    # Per-head scores via the batch-invariant block-diagonal scaled-q matrix (MXU).
    s = jnp.dot(k.astype(jnp.bfloat16), qbd_ref[...],
                preferred_element_type=jnp.float32)              # (TBp*S, H)
    # Per-example softmax + weighted sum: static unroll over TBp (<= 8) on small
    # (S, H)/(S, D) slices; the heavy matmuls above stay batched.
    for b in range(tbp):
        lo, hi = b * seq, (b + 1) * seq
        s_b = s[lo:hi, :]
        s_b = s_b - jnp.max(s_b, axis=0, keepdims=True)
        p_b = jnp.exp(s_b)
        p_b = p_b * pl.reciprocal(jnp.sum(p_b, axis=0, keepdims=True), approx=True)
        # Broadcast each head's prob across its head_dim lanes with an MXU matmul.
        p_full = jnp.dot(p_b.astype(jnp.bfloat16), exp_ref[...],
                         preferred_element_type=jnp.float32)     # (S, D)
        o_ref[0, b:b + 1, :] = jnp.sum(p_full * v[lo:hi, :], axis=0, keepdims=True)


def _mean_pool_kernel(x_ref, o_ref):
    """Mean pooling over the sequence for TBp examples per grid step (f32)."""
    # TODO(synk): for very long sequences add an "arbitrary" S-tile grid axis with a
    # VMEM accumulator instead of loading the full (TBp*S, D) block.
    tbp = o_ref.shape[1]
    seq = x_ref.shape[0] // tbp
    x = x_ref[...]
    for b in range(tbp):
        o_ref[0, b:b + 1, :] = jnp.mean(x[b * seq:(b + 1) * seq, :], axis=0,
                                        keepdims=True)


def _action_head(pooled, wa1, ba1, wa2, ba2):
    """Linear -> GELU -> Linear action head (bf16 matmuls, f32 accumulation)."""
    a1 = _gelu(jnp.dot(pooled.astype(jnp.bfloat16), wa1,
                       preferred_element_type=jnp.float32) + ba1)
    return jnp.dot(a1.astype(jnp.bfloat16), wa2,
                   preferred_element_type=jnp.float32) + ba2


def _action_head_kernel(pooled_ref, wa1_ref, ba1_ref, wa2_ref, ba2_ref, o_ref):
    o_ref[...] = _action_head(pooled_ref[...], wa1_ref[...], ba1_ref[...],
                              wa2_ref[...], ba2_ref[...]).astype(o_ref.dtype)


def _map_head_fused_kernel(pooled_ref, wo_ref, bo_ref, lng_ref, lnb_ref,
                           w1_ref, b1_ref, w2_ref, b2_ref,
                           wa1_ref, ba1_ref, wa2_ref, ba2_ref, o_ref):
    """TB examples per step: out-proj + LayerNorm + MLP residual + action head
    (used when all head weights fit the VMEM budget)."""
    attn = jnp.dot(pooled_ref[...].astype(jnp.bfloat16), wo_ref[...],
                   preferred_element_type=jnp.float32) + bo_ref[...]
    mu = jnp.mean(attn, axis=-1, keepdims=True)
    var = jnp.mean(jnp.square(attn - mu), axis=-1, keepdims=True)
    y = (attn - mu) * jax.lax.rsqrt(var + 1e-5) * lng_ref[...] + lnb_ref[...]
    h1 = _gelu(jnp.dot(y.astype(jnp.bfloat16), w1_ref[...],
                       preferred_element_type=jnp.float32) + b1_ref[...])
    m = jnp.dot(h1.astype(jnp.bfloat16), w2_ref[...],
                preferred_element_type=jnp.float32) + b2_ref[...]
    o_ref[...] = _action_head(attn + m, wa1_ref[...], ba1_ref[...],
                              wa2_ref[...], ba2_ref[...]).astype(o_ref.dtype)


# ---- K-tiled (weight-streaming) MAP head chain: for production llm_dim ------------
def _wo_ln_kernel(pooled_ref, wo_ref, bo_ref, lng_ref, lnb_ref,
                  attn_ref, y_ref, acc_ref):
    """attn = pooled @ Wo + bo (K-tiled over D); y = LayerNorm(attn)."""
    k = pl.program_id(1)

    @pl.when(k == 0)
    def _():
        acc_ref[...] = jnp.zeros_like(acc_ref)

    acc_ref[...] += jnp.dot(pooled_ref[...].astype(jnp.bfloat16), wo_ref[...],
                            preferred_element_type=jnp.float32)

    @pl.when(k == pl.num_programs(1) - 1)
    def _():
        attn = acc_ref[...] + bo_ref[...]
        attn_ref[...] = attn
        mu = jnp.mean(attn, axis=-1, keepdims=True)
        var = jnp.mean(jnp.square(attn - mu), axis=-1, keepdims=True)
        y_ref[...] = ((attn - mu) * jax.lax.rsqrt(var + 1e-5) * lng_ref[...]
                      + lnb_ref[...]).astype(y_ref.dtype)


def _fc1_kernel(y_ref, w1_ref, b1_ref, h1_ref, acc_ref):
    """h1 = GELU(y @ W1 + b1) (K-tiled over D)."""
    k = pl.program_id(1)

    @pl.when(k == 0)
    def _():
        acc_ref[...] = jnp.zeros_like(acc_ref)

    acc_ref[...] += jnp.dot(y_ref[...], w1_ref[...],
                            preferred_element_type=jnp.float32)

    @pl.when(k == pl.num_programs(1) - 1)
    def _():
        h1_ref[...] = _gelu(acc_ref[...] + b1_ref[...]).astype(h1_ref.dtype)


def _fc2_action_kernel(h1_ref, w2_ref, attn_ref, b2_ref,
                       wa1_ref, ba1_ref, wa2_ref, ba2_ref, o_ref, acc_ref):
    """pooled_out = attn + h1 @ W2 + b2 (K-tiled over mlp_dim), then action head."""
    k = pl.program_id(1)

    @pl.when(k == 0)
    def _():
        acc_ref[...] = jnp.zeros_like(acc_ref)

    acc_ref[...] += jnp.dot(h1_ref[...], w2_ref[...],
                            preferred_element_type=jnp.float32)

    @pl.when(k == pl.num_programs(1) - 1)
    def _():
        pooled_out = attn_ref[...] + acc_ref[...] + b2_ref[...]
        o_ref[...] = _action_head(pooled_out, wa1_ref[...], ba1_ref[...],
                                  wa2_ref[...], ba2_ref[...]).astype(o_ref.dtype)


# ----------------------------------------------------------------------------
# Wrapper
# ----------------------------------------------------------------------------
def mlp_action_head_forward(x, params, use_map: bool, *, head_streaming=None):
    """x: (B, S, D) float32 -> (B, A) float32 (MLPActionHead.forward)."""
    B, S, D = x.shape
    A = params["wa2"].shape[1]
    mlp_dim = params["w1"].shape[1]
    A_pad = _round_up(A, 128)
    bf16, f32 = jnp.bfloat16, jnp.float32

    # Resolve feature probes before any kernel tracing (cached afterwards).
    _supports("buffered_single")
    _supports("erf")

    # Action-head weights, zero-padded so output stores are lane-dense (mult of 128).
    wa1 = jnp.pad(params["wa1"], ((0, 0), (0, A_pad - A))).astype(bf16)
    ba1 = jnp.pad(params["ba1"], ((0, 0), (0, A_pad - A))).astype(f32)
    wa2 = jnp.pad(params["wa2"], ((0, A_pad - A), (0, A_pad - A))).astype(bf16)
    ba2 = jnp.pad(params["ba2"], ((0, 0), (0, A_pad - A))).astype(f32)

    # ---- stage 1: pooling -> (B, D) f32 (x consumed in f32; no wrapper pad/cast) ----
    TBp = _pool_batch_tile(B, S, D, use_map)
    num_pt = B // TBp
    x_flat = x.reshape(B * S, D)                       # free row-major reshape

    if use_map:
        H = params["num_heads"]
        hd = D // H
        # Hoisted, batch-invariant probe query projection, folded (with the
        # 1/sqrt(head_dim) scale) into a block-diagonal (D, H) matrix.
        q = params["probe"] @ params["wq"] + params["bq"]            # (1, D)
        head_of = jnp.arange(D) // hd
        mask = (head_of[:, None] == jnp.arange(H)[None, :]).astype(f32)  # (D, H)
        qbd = ((mask * q[0][:, None]) * (1.0 / (hd ** 0.5))).astype(bf16)
        expand = mask.T.astype(bf16)                                 # (H, D)
        wk, bk = params["wk"].astype(bf16), params["bk"].astype(f32)
        wv, bv = params["wv"].astype(bf16), params["bv"].astype(f32)

        pool_consts = (wk, wv, bk, bv, qbd, expand)
        pooled3 = pl.pallas_call(
            _map_pool_kernel,
            out_shape=jax.ShapeDtypeStruct((num_pt, TBp, D), f32),
            grid=(num_pt,),
            in_specs=[pl.BlockSpec((TBp * S, D), lambda b: (b, 0))]
                     + [_const_spec(a) for a in pool_consts],
            out_specs=pl.BlockSpec((1, TBp, D), lambda b: (b, 0, 0)),
            compiler_params=_compiler_params(
                ("parallel",), pool_consts,
                stream_bytes=TBp * S * D * 4 + TBp * D * 4,
                scratch_bytes=12 * TBp * S * D),
        )(x_flat, *pool_consts)
    else:
        pooled3 = pl.pallas_call(
            _mean_pool_kernel,
            out_shape=jax.ShapeDtypeStruct((num_pt, TBp, D), f32),
            grid=(num_pt,),
            in_specs=[pl.BlockSpec((TBp * S, D), lambda b: (b, 0))],
            out_specs=pl.BlockSpec((1, TBp, D), lambda b: (b, 0, 0)),
            compiler_params=_compiler_params(
                ("parallel",), (),
                stream_bytes=TBp * S * D * 4 + TBp * D * 4,
                scratch_bytes=4 * TBp * S * D),
        )(x_flat)
    pooled = pooled3.reshape(B, D)

    # ---- stage 2: batched head (only the small pooled tensor gets padded) ----------
    TB = _head_batch_tile(B)
    B_pad = _round_up(B, TB)
    num_tiles = B_pad // TB
    pooled_p = pooled if B_pad == B else jnp.pad(pooled, ((0, B_pad - B), (0, 0)))
    out_shape = jax.ShapeDtypeStruct((B_pad, A_pad), f32)

    if not use_map:
        ah_consts = (wa1, ba1, wa2, ba2)
        out = pl.pallas_call(
            _action_head_kernel,
            out_shape=out_shape,
            grid=(num_tiles,),
            in_specs=[pl.BlockSpec((TB, D), lambda i: (i, 0))]
                     + [_const_spec(a) for a in ah_consts],
            out_specs=pl.BlockSpec((TB, A_pad), lambda i: (i, 0)),
            compiler_params=_compiler_params(
                ("parallel",), ah_consts,
                stream_bytes=TB * D * 4 + TB * A_pad * 4,
                scratch_bytes=2 * TB * A_pad * 4),
        )(pooled_p, *ah_consts)
        return out[:B, :A]

    # ---- MAP head: out-proj + LayerNorm + MLP residual + action head ---------------
    wo, bo = params["wo"].astype(bf16), params["bo"].astype(f32)
    lng, lnb = params["ln_g"].astype(f32), params["ln_b"].astype(f32)
    w1, b1 = params["w1"].astype(bf16), params["b1"].astype(f32)
    w2, b2 = params["w2"].astype(bf16), params["b2"].astype(f32)
    head_consts = (wo, bo, lng, lnb, w1, b1, w2, b2, wa1, ba1, wa2, ba2)

    wmult = 1 if _supports("buffered_single") else 2
    const_bytes = sum(int(a.size) * a.dtype.itemsize for a in head_consts)
    fused_need = (wmult * const_bytes
                  + 2 * (TB * D * 4 + TB * A_pad * 4)
                  + TB * (3 * D + mlp_dim + 2 * A_pad) * 4 + (4 << 20))
    if head_streaming is None:
        head_streaming = fused_need > _vmem_budget()

    if not head_streaming:
        out = pl.pallas_call(
            _map_head_fused_kernel,
            out_shape=out_shape,
            grid=(num_tiles,),
            in_specs=[pl.BlockSpec((TB, D), lambda i: (i, 0))]
                     + [_const_spec(a) for a in head_consts],
            out_specs=pl.BlockSpec((TB, A_pad), lambda i: (i, 0)),
            compiler_params=_compiler_params(
                ("parallel",), head_consts,
                stream_bytes=TB * D * 4 + TB * A_pad * 4,
                scratch_bytes=TB * (3 * D + mlp_dim + 2 * A_pad) * 4),
        )(pooled_p, *head_consts)
        return out[:B, :A]

    # K-tiled weight-streaming chain (Wo/W1/W2 are streamed along the contraction dim
    # with an f32 VMEM accumulator; required at production llm_dim on v7x's 64 MiB).
    dk, nk = _k_tile(D), D // _k_tile(D)
    dk2, nk2 = _k_tile(mlp_dim), mlp_dim // _k_tile(mlp_dim)

    attn, y = pl.pallas_call(
        _wo_ln_kernel,
        out_shape=(jax.ShapeDtypeStruct((B_pad, D), f32),
                   jax.ShapeDtypeStruct((B_pad, D), bf16)),
        grid=(num_tiles, nk),
        in_specs=[pl.BlockSpec((TB, dk), lambda i, k: (i, k)),
                  pl.BlockSpec((dk, D), lambda i, k: (k, 0)),
                  _const_spec(bo), _const_spec(lng), _const_spec(lnb)],
        out_specs=(pl.BlockSpec((TB, D), lambda i, k: (i, 0)),
                   pl.BlockSpec((TB, D), lambda i, k: (i, 0))),
        scratch_shapes=[pltpu.VMEM((TB, D), f32)],
        compiler_params=_compiler_params(
            ("parallel", "arbitrary"), (bo, lng, lnb),
            stream_bytes=TB * dk * 4 + dk * D * 2 + TB * D * 4 + TB * D * 2,
            scratch_bytes=2 * TB * D * 4),
    )(pooled_p, wo, bo, lng, lnb)

    h1 = pl.pallas_call(
        _fc1_kernel,
        out_shape=jax.ShapeDtypeStruct((B_pad, mlp_dim), bf16),
        grid=(num_tiles, nk),
        in_specs=[pl.BlockSpec((TB, dk), lambda i, k: (i, k)),
                  pl.BlockSpec((dk, mlp_dim), lambda i, k: (k, 0)),
                  _const_spec(b1)],
        out_specs=pl.BlockSpec((TB, mlp_dim), lambda i, k: (i, 0)),
        scratch_shapes=[pltpu.VMEM((TB, mlp_dim), f32)],
        compiler_params=_compiler_params(
            ("parallel", "arbitrary"), (b1,),
            stream_bytes=TB * dk * 2 + dk * mlp_dim * 2 + TB * mlp_dim * 2,
            scratch_bytes=2 * TB * mlp_dim * 4),
    )(y, w1, b1)

    out = pl.pallas_call(
        _fc2_action_kernel,
        out_shape=out_shape,
        grid=(num_tiles, nk2),
        in_specs=[pl.BlockSpec((TB, dk2), lambda i, k: (i, k)),
                  pl.BlockSpec((dk2, D), lambda i, k: (k, 0)),
                  pl.BlockSpec((TB, D), lambda i, k: (i, 0)),
                  _const_spec(b2), _const_spec(wa1), _const_spec(ba1),
                  _const_spec(wa2), _const_spec(ba2)],
        out_specs=pl.BlockSpec((TB, A_pad), lambda i, k: (i, 0)),
        scratch_shapes=[pltpu.VMEM((TB, D), f32)],
        compiler_params=_compiler_params(
            ("parallel", "arbitrary"), (b2, wa1, ba1, wa2, ba2),
            stream_bytes=TB * dk2 * 2 + dk2 * D * 2 + TB * D * 4 + TB * A_pad * 4,
            scratch_bytes=TB * D * 4 + 2 * TB * A_pad * 4),
    )(h1, w2, attn, b2, wa1, ba1, wa2, ba2)
    return out[:B, :A]


# ----------------------------------------------------------------------------
# Deterministic parameter init (shapes follow the module's __init__)
# ----------------------------------------------------------------------------
def init_params(key, llm_dim, action_dim, num_heads, mlp_dim):
    ks = jax.random.split(key, 17)

    def w(k, shape, scale=0.02):
        return jax.random.normal(k, shape, dtype=jnp.float32) * scale

    return {
        "num_heads": num_heads,
        # MAPHead
        "probe": w(ks[0], (1, llm_dim)),
        "wq": w(ks[1], (llm_dim, llm_dim)), "bq": w(ks[2], (1, llm_dim)),
        "wk": w(ks[3], (llm_dim, llm_dim)), "bk": w(ks[4], (1, llm_dim)),
        "wv": w(ks[5], (llm_dim, llm_dim)), "bv": w(ks[6], (1, llm_dim)),
        "wo": w(ks[7], (llm_dim, llm_dim)), "bo": w(ks[8], (1, llm_dim)),
        "ln_g": jnp.ones((1, llm_dim), jnp.float32),
        "ln_b": jnp.zeros((1, llm_dim), jnp.float32),
        "w1": w(ks[9], (llm_dim, mlp_dim)),  "b1": w(ks[10], (1, mlp_dim)),
        "w2": w(ks[11], (mlp_dim, llm_dim)), "b2": w(ks[12], (1, llm_dim)),
        # action head (mlp_type='gelu')
        "wa1": w(ks[13], (llm_dim, action_dim)),    "ba1": w(ks[14], (1, action_dim)),
        "wa2": w(ks[15], (action_dim, action_dim)), "ba2": w(ks[16], (1, action_dim)),
    }


# ----------------------------------------------------------------------------
# Pure-JAX f32 reference (mirrors the PyTorch forward) for verification
# ----------------------------------------------------------------------------
def reference_forward(x, params, use_map):
    if use_map:
        B, S, D = x.shape
        H = params["num_heads"]; hd = D // H
        probe = jnp.broadcast_to(params["probe"][None], (B, 1, D))
        q = probe @ params["wq"] + params["bq"]
        k = x @ params["wk"] + params["bk"]
        v = x @ params["wv"] + params["bv"]
        q = q.reshape(B, 1, H, hd).transpose(0, 2, 1, 3)
        k = k.reshape(B, S, H, hd).transpose(0, 2, 1, 3)
        v = v.reshape(B, S, H, hd).transpose(0, 2, 1, 3)
        s = jnp.einsum("bhqd,bhkd->bhqk", q, k) / jnp.sqrt(jnp.float32(hd))
        p = jax.nn.softmax(s, axis=-1)
        o = jnp.einsum("bhqk,bhkd->bhqd", p, v).transpose(0, 2, 1, 3).reshape(B, 1, D)
        attn = o @ params["wo"] + params["bo"]
        mu = attn.mean(-1, keepdims=True)
        var = jnp.square(attn - mu).mean(-1, keepdims=True)
        y = (attn - mu) / jnp.sqrt(var + 1e-5) * params["ln_g"] + params["ln_b"]
        m = (jax.nn.gelu(y @ params["w1"] + params["b1"], approximate=False)
             @ params["w2"] + params["b2"])
        pooled = (attn + m)[:, 0, :]
    else:
        pooled = x.mean(axis=1)
    a1 = jax.nn.gelu(pooled @ params["wa1"] + params["ba1"], approximate=False)
    return a1 @ params["wa2"] + params["ba2"]


# ----------------------------------------------------------------------------
if __name__ == "__main__":
    B, S, D, A, H = 2, 8, 32, 8, 4          # batch, seq, llm_dim, action_dim, heads
    MLP_DIM = 4 * D                          # MLPBlock default mlp_dim

    key = jax.random.PRNGKey(0)
    kx, kp = jax.random.split(key)
    llm_output = jax.random.normal(kx, (B, S, D), dtype=jnp.float32)
    params = init_params(kp, D, A, H, MLP_DIM)

    ok = True
    # Exercise the fused head, the K-tiled streaming head (nk == 1 at these dims),
    # and the mean-pool path.
    for use_map, streaming in ((True, False), (True, True), (False, None)):
        out = mlp_action_head_forward(llm_output, params, use_map,
                                      head_streaming=streaming)
        out = jax.block_until_ready(out)
        ref = reference_forward(llm_output, params, use_map)
        if out.shape != (B, A) or not bool(jnp.all(jnp.isfinite(out))):
            ok = False
        # bf16 matmuls + approx softmax reciprocal vs f32 reference -> modest tol.
        if not jnp.allclose(out, ref, atol=1e-2, rtol=5e-2):
            ok = False
    print("KERNEL_OK" if ok else "MISMATCH")
</pallas_src>

<mosaic_0001>
module attributes {stable_mosaic.version = 11 : i64} {
  func.func @_k(%arg0: i32, %arg1: memref<8x128xf32, #tpu.memory_space<vmem>>, %arg2: memref<8x128xf32, #tpu.memory_space<vmem>>) attributes {dimension_semantics = [#tpu.dimension_semantics<arbitrary>], iteration_bounds = array<i64: 2>, scalar_prefetch = 0 : i64, scratch_operands = 0 : i64, tpu.core_type = #tpu.core_type<tc>, window_params = [{pipeline_mode = #tpu.pipeline_mode<synchronous>, transform_indices = @transform_0, window_bounds = array<i64: 8, 128>}, {pipeline_mode = #tpu.pipeline_mode<synchronous>, transform_indices = @transform_1, window_bounds = array<i64: 8, 128>}]} {
    %c0 = arith.constant 0 : index
    %c0_0 = arith.constant 0 : index
    %0 = vector.load %arg1[%c0, %c0_0] : memref<8x128xf32, #tpu.memory_space<vmem>>, vector<8x128xf32>
    %cst = arith.constant 1.000000e+00 : f32
    %1 = vector.broadcast %cst : f32 to vector<8x128xf32>
    %2 = arith.addf %0, %1 : vector<8x128xf32>
    %c0_1 = arith.constant 0 : index
    %c0_2 = arith.constant 0 : index
    %3 = vector.load %arg2[%c0_1, %c0_2] : memref<8x128xf32, #tpu.memory_space<vmem>>, vector<8x128xf32>
    tpu.vector_store %arg2[%c0_1, %c0_2], %2 {strides = array<i32>} : memref<8x128xf32, #tpu.memory_space<vmem>>, vector<8x128xf32>,
    return
  }
  func.func @transform_0(%arg0: i32) -> (i32, i32) {
    %c0_i32 = arith.constant 0 : i32
    %c0_i32_0 = arith.constant 0 : i32
    %c0_i32_1 = arith.constant 0 : i32
    return %c0_i32, %c0_i32_0 : i32, i32
  }
  func.func @transform_1(%arg0: i32) -> (i32, i32) {
    %c0_i32 = arith.constant 0 : i32
    %c0_i32_0 = arith.constant 0 : i32
    %c0_i32_1 = arith.constant 0 : i32
    return %c0_i32, %c0_i32_0 : i32, i32
  }
}

module attributes {stable_mosaic.version = 11 : i64} {
  func.func @_k(%arg0: memref<8x128xf32, #tpu.memory_space<vmem>>, %arg1: memref<8x128xf32, #tpu.memory_space<vmem>>) attributes {dimension_semantics = [], scalar_prefetch = 0 : i64, scratch_operands = 0 : i64, tpu.core_type = #tpu.core_type<tc>} {
    %c0 = arith.constant 0 : index
    %c0_0 = arith.constant 0 : index
    %0 = vector.load %arg0[%c0, %c0_0] : memref<8x128xf32, #tpu.memory_space<vmem>>, vector<8x128xf32>
    %1 = math.erf %0 : vector<8x128xf32>
    %c0_1 = arith.constant 0 : index
    %c0_2 = arith.constant 0 : index
    %2 = vector.load %arg1[%c0_1, %c0_2] : memref<8x128xf32, #tpu.memory_space<vmem>>, vector<8x128xf32>
    tpu.vector_store %arg1[%c0_1, %c0_2], %1 {strides = array<i32>} : memref<8x128xf32, #tpu.memory_space<vmem>>, vector<8x128xf32>,
    return
  }
}

module attributes {stable_mosaic.version = 11 : i64} {
  func.func @_map_pool_kernel(%arg0: i32, %arg1: memref<16x32xf32, #tpu.memory_space<vmem>>, %arg2: memref<32x32xbf16, #tpu.memory_space<vmem>>, %arg3: memref<32x32xbf16, #tpu.memory_space<vmem>>, %arg4: memref<1x32xf32, #tpu.memory_space<vmem>>, %arg5: memref<1x32xf32, #tpu.memory_space<vmem>>, %arg6: memref<32x4xbf16, #tpu.memory_space<vmem>>, %arg7: memref<4x32xbf16, #tpu.memory_space<vmem>>, %arg8: memref<1x2x32xf32, #tpu.memory_space<vmem>>) attributes {dimension_semantics = [#tpu.dimension_semantics<parallel>], iteration_bounds = array<i64: 1>, scalar_prefetch = 0 : i64, scratch_operands = 0 : i64, tpu.core_type = #tpu.core_type<tc>, window_params = [{transform_indices = @transform_0, window_bounds = array<i64: 16, 32>}, {pipeline_mode = #tpu.pipeline_mode<synchronous>, transform_indices = @transform_1, window_bounds = array<i64: 32, 32>}, {pipeline_mode = #tpu.pipeline_mode<synchronous>, transform_indices = @transform_2, window_bounds = array<i64: 32, 32>}, {pipeline_mode = #tpu.pipeline_mode<synchronous>, transform_indices = @transform_3, window_bounds = array<i64: 1, 32>}, {pipeline_mode = #tpu.pipeline_mode<synchronous>, transform_indices = @transform_4, window_bounds = array<i64: 1, 32>}, {pipeline_mode = #tpu.pipeline_mode<synchronous>, transform_indices = @transform_5, window_bounds = array<i64: 32, 4>}, {pipeline_mode = #tpu.pipeline_mode<synchronous>, transform_indices = @transform_6, window_bounds = array<i64: 4, 32>}, {transform_indices = @transform_7, window_bounds = array<i64: 1, 2, 32>}]} {
    %c0 = arith.constant 0 : index
    %c0_0 = arith.constant 0 : index
    %0 = vector.load %arg1[%c0, %c0_0] : memref<16x32xf32, #tpu.memory_space<vmem>>, vector<16x32xf32>
    %1 = arith.truncf %0 : vector<16x32xf32> to vector<16x32xbf16>
    %c0_1 = arith.constant 0 : index
    %c0_2 = arith.constant 0 : index
    %2 = vector.load %arg2[%c0_1, %c0_2] : memref<32x32xbf16, #tpu.memory_space<vmem>>, vector<32x32xbf16>
    %cst = arith.constant dense<0.000000e+00> : vector<16x32xf32>
    %3 = tpu.matmul %1, %2, %cst {dimension_numbers = #tpu.dot_dimension_numbers<[1], [0], [0], [1], [0, 0, 1, 1], [], []>} : vector<16x32xbf16>, vector<32x32xbf16>, vector<16x32xf32> -> vector<16x32xf32>
    %c0_3 = arith.constant 0 : index
    %c0_4 = arith.constant 0 : index
    %4 = vector.load %arg4[%c0_3, %c0_4] : memref<1x32xf32, #tpu.memory_space<vmem>>, vector<1x32xf32>
    %5 = vector.broadcast %4 : vector<1x32xf32> to vector<16x32xf32>
    %6 = arith.addf %3, %5 : vector<16x32xf32>
    %c0_5 = arith.constant 0 : index
    %c0_6 = arith.constant 0 : index
    %7 = vector.load %arg3[%c0_5, %c0_6] : memref<32x32xbf16, #tpu.memory_space<vmem>>, vector<32x32xbf16>
    %cst_7 = arith.constant dense<0.000000e+00> : vector<16x32xf32>
    %8 = tpu.matmul %1, %7, %cst_7 {dimension_numbers = #tpu.dot_dimension_numbers<[1], [0], [0], [1], [0, 0, 1, 1], [], []>} : vector<16x32xbf16>, vector<32x32xbf16>, vector<16x32xf32> -> vector<16x32xf32>
    %c0_8 = arith.constant 0 : index
    %c0_9 = arith.constant 0 : index
    %9 = vector.load %arg5[%c0_8, %c0_9] : memref<1x32xf32, #tpu.memory_space<vmem>>, vector<1x32xf32>
    %10 = vector.broadcast %9 : vector<1x32xf32> to vector<16x32xf32>
    %11 = arith.addf %8, %10 : vector<16x32xf32>
    %12 = arith.truncf %6 : vector<16x32xf32> to vector<16x32xbf16>
    %c0_10 = arith.constant 0 : index
    %c0_11 = arith.constant 0 : index
    %13 = vector.load %arg6[%c0_10, %c0_11] : memref<32x4xbf16, #tpu.memory_space<vmem>>, vector<32x4xbf16>
    %cst_12 = arith.constant dense<0.000000e+00> : vector<16x4xf32>
    %14 = tpu.matmul %12, %13, %cst_12 {dimension_numbers = #tpu.dot_dimension_numbers<[1], [0], [0], [1], [0, 0, 1, 1], [], []>} : vector<16x32xbf16>, vector<32x4xbf16>, vector<16x4xf32> -> vector<16x4xf32>
    %15 = vector.extract_strided_slice %14 {offsets = [0, 0], sizes = [8, 4], strides = [1, 1]} : vector<16x4xf32> to vector<8x4xf32>
    %cst_13 = arith.constant dense<0xFF800000> : vector<4xf32>
    %16 = vector.multi_reduction <maximumf>, %15, %cst_13 [0] : vector<8x4xf32> to vector<4xf32>
    %17 = vector.shape_cast %16 : vector<4xf32> to vector<1x4xf32>
    %18 = vector.broadcast %17 : vector<1x4xf32> to vector<8x4xf32>
    %19 = arith.subf %15, %18 : vector<8x4xf32>
    %20 = math.exp %19 : vector<8x4xf32>
    %cst_14 = arith.constant dense<0.000000e+00> : vector<4xf32>
    %21 = vector.multi_reduction <add>, %20, %cst_14 [0] : vector<8x4xf32> to vector<4xf32>
    %22 = vector.shape_cast %21 : vector<4xf32> to vector<1x4xf32>
    %23 = tpu.reciprocal %22 {approx = true} : vector<1x4xf32> -> vector<1x4xf32>
    %24 = vector.broadcast %23 : vector<1x4xf32> to vector<8x4xf32>
    %25 = arith.mulf %20, %24 : vector<8x4xf32>
    %26 = arith.truncf %25 : vector<8x4xf32> to vector<8x4xbf16>
    %c0_15 = arith.constant 0 : index
    %c0_16 = arith.constant 0 : index
    %27 = vector.load %arg7[%c0_15, %c0_16] : memref<4x32xbf16, #tpu.memory_space<vmem>>, vector<4x32xbf16>
    %cst_17 = arith.constant dense<0.000000e+00> : vector<8x32xf32>
    %28 = tpu.matmul %26, %27, %cst_17 {dimension_numbers = #tpu.dot_dimension_numbers<[1], [0], [0], [1], [0, 0, 1, 1], [], []>} : vector<8x4xbf16>, vector<4x32xbf16>, vector<8x32xf32> -> vector<8x32xf32>
    %29 = vector.extract_strided_slice %11 {offsets = [0, 0], sizes = [8, 32], strides = [1, 1]} : vector<16x32xf32> to vector<8x32xf32>
    %30 = arith.mulf %28, %29 : vector<8x32xf32>
    %cst_18 = arith.constant dense<0.000000e+00> : vector<32xf32>
    %31 = vector.multi_reduction <add>, %30, %cst_18 [0] : vector<8x32xf32> to vector<32xf32>
    %32 = vector.shape_cast %31 : vector<32xf32> to vector<1x32xf32>
    %c0_19 = arith.constant 0 : index
    %c0_20 = arith.constant 0 : index
    %c0_21 = arith.constant 0 : index
    %33 = vector.load %arg8[%c0_19, %c0_20, %c0_21] : memref<1x2x32xf32, #tpu.memory_space<vmem>>, vector<1x1x32xf32>
    %34 = vector.shape_cast %33 : vector<1x1x32xf32> to vector<1x32xf32>
    %35 = vector.shape_cast %32 : vector<1x32xf32> to vector<1x1x32xf32>
    tpu.vector_store %arg8[%c0_19, %c0_20, %c0_21], %35 {strides = array<i32>} : memref<1x2x32xf32, #tpu.memory_space<vmem>>, vector<1x1x32xf32>,
    %36 = vector.extract_strided_slice %14 {offsets = [8, 0], sizes = [8, 4], strides = [1, 1]} : vector<16x4xf32> to vector<8x4xf32>
    %cst_22 = arith.constant dense<0xFF800000> : vector<4xf32>
    %37 = vector.multi_reduction <maximumf>, %36, %cst_22 [0] : vector<8x4xf32> to vector<4xf32>
    %38 = vector.shape_cast %37 : vector<4xf32> to vector<1x4xf32>
    %39 = vector.broadcast %38 : vector<1x4xf32> to vector<8x4xf32>
    %40 = arith.subf %36, %39 : vector<8x4xf32>
    %41 = math.exp %40 : vector<8x4xf32>
    %cst_23 = arith.constant dense<0.000000e+00> : vector<4xf32>
    %42 = vector.multi_reduction <add>, %41, %cst_23 [0] : vector<8x4xf32> to vector<4xf32>
    %43 = vector.shape_cast %42 : vector<4xf32> to vector<1x4xf32>
    %44 = tpu.reciprocal %43 {approx = true} : vector<1x4xf32> -> vector<1x4xf32>
    %45 = vector.broadcast %44 : vector<1x4xf32> to vector<8x4xf32>
    %46 = arith.mulf %41, %45 : vector<8x4xf32>
    %47 = arith.truncf %46 : vector<8x4xf32> to vector<8x4xbf16>
    %c0_24 = arith.constant 0 : index
    %c0_25 = arith.constant 0 : index
    %48 = vector.load %arg7[%c0_24, %c0_25] : memref<4x32xbf16, #tpu.memory_space<vmem>>, vector<4x32xbf16>
    %cst_26 = arith.constant dense<0.000000e+00> : vector<8x32xf32>
    %49 = tpu.matmul %47, %48, %cst_26 {dimension_numbers = #tpu.dot_dimension_numbers<[1], [0], [0], [1], [0, 0, 1, 1], [], []>} : vector<8x4xbf16>, vector<4x32xbf16>, vector<8x32xf32> -> vector<8x32xf32>
    %50 = vector.extract_strided_slice %11 {offsets = [8, 0], sizes = [8, 32], strides = [1, 1]} : vector<16x32xf32> to vector<8x32xf32>
    %51 = arith.mulf %49, %50 : vector<8x32xf32>
    %cst_27 = arith.constant dense<0.000000e+00> : vector<32xf32>
    %52 = vector.multi_reduction <add>, %51, %cst_27 [0] : vector<8x32xf32> to vector<32xf32>
    %53 = vector.shape_cast %52 : vector<32xf32> to vector<1x32xf32>
    %c0_28 = arith.constant 0 : index
    %c1 = arith.constant 1 : index
    %c0_29 = arith.constant 0 : index
    %54 = vector.load %arg8[%c0_28, %c1, %c0_29] : memref<1x2x32xf32, #tpu.memory_space<vmem>>, vector<1x1x32xf32>
    %55 = vector.shape_cast %54 : vector<1x1x32xf32> to vector<1x32xf32>
    %56 = vector.shape_cast %53 : vector<1x32xf32> to vector<1x1x32xf32>
    tpu.vector_store %arg8[%c0_28, %c1, %c0_29], %56 {strides = array<i32>} : memref<1x2x32xf32, #tpu.memory_space<vmem>>, vector<1x1x32xf32>,
    return
  }
  func.func @transform_0(%arg0: i32) -> (i32, i32) {
    %c0_i32 = arith.constant 0 : i32
    %c0_i32_0 = arith.constant 0 : i32
    return %arg0, %c0_i32 : i32, i32
  }
  func.func @transform_1(%arg0: i32) -> (i32, i32) {
    %c0_i32 = arith.constant 0 : i32
    %c0_i32_0 = arith.constant 0 : i32
    %c0_i32_1 = arith.constant 0 : i32
    return %c0_i32, %c0_i32_0 : i32, i32
  }
  func.func @transform_2(%arg0: i32) -> (i32, i32) {
    %c0_i32 = arith.constant 0 : i32
    %c0_i32_0 = arith.constant 0 : i32
    %c0_i32_1 = arith.constant 0 : i32
    return %c0_i32, %c0_i32_0 : i32, i32
  }
  func.func @transform_3(%arg0: i32) -> (i32, i32) {
    %c0_i32 = arith.constant 0 : i32
    %c0_i32_0 = arith.constant 0 : i32
    %c0_i32_1 = arith.constant 0 : i32
    return %c0_i32, %c0_i32_0 : i32, i32
  }
  func.func @transform_4(%arg0: i32) -> (i32, i32) {
    %c0_i32 = arith.constant 0 : i32
    %c0_i32_0 = arith.constant 0 : i32
    %c0_i32_1 = arith.constant 0 : i32
    return %c0_i32, %c0_i32_0 : i32, i32
  }
  func.func @transform_5(%arg0: i32) -> (i32, i32) {
    %c0_i32 = arith.constant 0 : i32
    %c0_i32_0 = arith.constant 0 : i32
    %c0_i32_1 = arith.constant 0 : i32
    return %c0_i32, %c0_i32_0 : i32, i32
  }
  func.func @transform_6(%arg0: i32) -> (i32, i32) {
    %c0_i32 = arith.constant 0 : i32
    %c0_i32_0 = arith.constant 0 : i32
    %c0_i32_1 = arith.constant 0 : i32
    return %c0_i32, %c0_i32_0 : i32, i32
  }
  func.func @transform_7(%arg0: i32) -> (i32, i32, i32) {
    %c0_i32 = arith.constant 0 : i32
    %c0_i32_0 = arith.constant 0 : i32
    %c0_i32_1 = arith.constant 0 : i32
    return %arg0, %c0_i32, %c0_i32_0 : i32, i32, i32
  }
}

</mosaic_0001>

<llo_original>
// kernel: tpu_custom_call.1
$region0: #{tpu_custom_call.1}
  #allocation0 [shape = 'u32[]', space=smem, size = 0x4, offset = 0x4, fixed_abs, tag = 'smem constant byte address 0x4 - core index']
  #allocation1 [shape = 'u32[144,128]{1,0:T(1,128)}', space=vmem, size = 0x12000, scoped, tag = 'internal scratch']
  %s0 = inlined_call_operand.hbm [shape: f32[8,128], index: 0, kind: input, shape index: {}]
  %s1 = inlined_call_operand.hbm [shape: f32[8,128], index: 1, kind: output, shape index: {}]
  %s2 = sld [smem:[#allocation0]]
  $region41: #{tpu_custom_call.1} parent=0
    _
  %s4 = ssub.s32 1, %s2
  %s5 = scalar_select 0, %s4, %s2
  $region1: #{tpu_custom_call.1} parent=0
    #allocation2 [shape = 'u8[4096]{0}', space=vmem, size = 0x1000, scoped, tag = 'input window, operand 0, single buffered']
    #allocation3 [shape = 's32[2]{0}', space=sflag, size = 0x8, scoped, tag = 'scoped memory for tpu_custom_call.1']
    #allocation4 [shape = 's32[2]{0}', space=sflag, size = 0x8, scoped, tag = 'scoped memory for tpu_custom_call.1']
    #allocation5 [shape = 'u8[4096]{0}', space=vmem, size = 0x1000, scoped, tag = 'output window, operand 0, single buffered']
    %6 = vsyncpa [#allocation3], 0
    %7 = vsyncpa [#allocation4], 0
    loop: start=0, step=1, limit=4
    $region2: #{tpu_custom_call.1} parent=1 // loop_pre_header
      _
    $region3: #{tpu_custom_call.1} parent=1 // loop_header
      %s9 = sphi 0, %s13
      %p10 = scmp.ge.s32.totalorder %s9, 4
      %s17 = sphi 0, %s17
      %s19 = sphi 0, %s17
      %s20 = sphi 0, %s19
      %s34 = sphi 0, %s20
      %s38 = sphi 0, %s38
      %s40 = sphi 0, %s38
      %s41 = sphi 0, %s40
      %s55 = sphi 0, %s41
    $region4: #{tpu_custom_call.1} parent=1 // loop_header_branch
      %12 = sbr.rel (%p10) target = $region8
    $region5: #{tpu_custom_call.1} parent=1 // loop_body
      %s14 = ssub.s32 %s9, 1
      %s15 = ssub.s32 %s9, 2
      %s16 = sadd.s32 %s9, 1
      %s18 = sadd.s32 %s17, 1
      %p21 = scmp.eq.s32.totalorder %s9, 1
      %p22 = scmp.ne.s32.totalorder %s17, %s19
      %p23 = scmp.eq.s32.totalorder %s9, 0
      %p24 = por %p22, %p23
      %p25 = scmp.ne.s32.totalorder %s17, %s19
      %p26 = scmp.eq.s32.totalorder %s14, 1
      %p27 = por %p25, %p26
      %p28 = scmp.ne.s32.totalorder %s19, %s20
      %p29 = scmp.eq.s32.totalorder %s14, 0
      %p30 = por %p28, %p29
      %p31 = scmp.ne.s32.totalorder %s19, %s20
      %p32 = scmp.eq.s32.totalorder %s15, 1
      %p33 = por %p31, %p32
      %p35 = scmp.ne.s32.totalorder %s20, %s34
      %p36 = scmp.eq.s32.totalorder %s15, 0
      %p37 = por %p35, %p36
      %s39 = sadd.s32 %s38, 1
      %p42 = scmp.eq.s32.totalorder %s9, 1
      %p43 = scmp.ne.s32.totalorder %s38, %s40
      %p44 = scmp.eq.s32.totalorder %s9, 0
      %p45 = por %p43, %p44
      %p46 = scmp.ne.s32.totalorder %s38, %s40
      %p47 = scmp.eq.s32.totalorder %s14, 1
      %p48 = por %p46, %p47
      %p49 = scmp.ne.s32.totalorder %s40, %s41
      %p50 = scmp.eq.s32.totalorder %s14, 0
      %p51 = por %p49, %p50
      %p52 = scmp.ne.s32.totalorder %s40, %s41
      %p53 = scmp.eq.s32.totalorder %s15, 1
      %p54 = por %p52, %p53
      %p56 = scmp.ne.s32.totalorder %s41, %s55
      %p57 = scmp.eq.s32.totalorder %s15, 0
      %p58 = por %p56, %p57
      %p59 = scmp.le.s32.totalorder 1, %s9
      %p60 = scmp.lt.s32.totalorder %s9, 3
      %p61 = pnand %p59, %p60
      %p62 = pneg %p61
      // Predicated region
      $region9: #{tpu_custom_call.1} parent=5 // pred_check
        _
      $region10: #{tpu_custom_call.1} parent=5 // pred_check_branch
        %64 = sbr.rel (%p61) target = $region12
      $region11: #{tpu_custom_call.1} parent=5 // pred_region
        %s65 = ssub.s32 %s9, 1
        // Predicated region
        $region13: #{tpu_custom_call.1} parent=11 // pred_check
          %p66 = pneg %p30
        $region14: #{tpu_custom_call.1} parent=11 // pred_check_branch
          %68 = sbr.rel (%p66) target = $region16
        $region15: #{tpu_custom_call.1} parent=11 // pred_region
          %s70 = ssub.s32 128, 128
          %71 = vsyncadd [#allocation3], %s70
          %s73 = sshll.u32 [#allocation2], 4
          %s74 = int_to_ptr.vmem [resolvable:$true] %s73
          %76 = dma.hbm_to_vmem [thread:$0]  %s0, 128, %s74, [#allocation3]
        $region16: #{tpu_custom_call.1} parent=11 // pred_fallthru
          _
      $region12: #{tpu_custom_call.1} parent=5 // pred_fallthru
        _
      %p77 = scmp.lt.s32.totalorder %s9, 2
      // Predicated region
      $region17: #{tpu_custom_call.1} parent=5 // pred_check
        %p78 = pneg %p77
      $region18: #{tpu_custom_call.1} parent=5 // pred_check_branch
        %80 = sbr.rel (%p78) target = $region20
      $region19: #{tpu_custom_call.1} parent=5 // pred_region
        _
      $region20: #{tpu_custom_call.1} parent=5 // pred_fallthru
        _
      %p81 = scmp.le.s32.totalorder 1, %s9
      %p82 = scmp.lt.s32.totalorder %s9, 3
      %p83 = pnand %p81, %p82
      %p84 = pneg %p83
      // Predicated region
      $region21: #{tpu_custom_call.1} parent=5 // pred_check
        _
      $region22: #{tpu_custom_call.1} parent=5 // pred_check_branch
        %86 = sbr.rel (%p83) target = $region24
      $region23: #{tpu_custom_call.1} parent=5 // pred_region
        %s87 = ssub.s32 %s9, 1
        // Predicated region
        $region25: #{tpu_custom_call.1} parent=23 // pred_check
          %p88 = pneg %p30
        $region26: #{tpu_custom_call.1} parent=23 // pred_check_branch
          %90 = sbr.rel (%p88) target = $region28
        $region27: #{tpu_custom_call.1} parent=23 // pred_region
          %91 = dma.done [#allocation3], 128
        $region28: #{tpu_custom_call.1} parent=23 // pred_fallthru
          _
        %p92 = pneg %p30
        %p93 = pneg %p27
        %p94 = pneg %p51
        %p95 = pneg %p48
        %v96 = vld [vmem:[#allocation2] sm:$0xff]
        %v97 = vadd.f32 %v96, 1.0
        %98 = vst [vmem:[#allocation5] sm:$0xff] %v97
        // Predicated region
        $region29: #{tpu_custom_call.1} parent=23 // pred_check
          %p99 = pneg %p48
        $region30: #{tpu_custom_call.1} parent=23 // pred_check_branch
          %101 = sbr.rel (%p99) target = $region32
        $region31: #{tpu_custom_call.1} parent=23 // pred_region
          %s103 = ssub.s32 128, 128
          %104 = vsyncadd [#allocation4], %s103
          %s106 = sshll.u32 [#allocation5], 4
          %s107 = int_to_ptr.vmem [resolvable:$true] %s106
          %109 = dma.vmem_to_hbm [thread:$0]  %s107, 128, %s1, [#allocation4]
        $region32: #{tpu_custom_call.1} parent=23 // pred_fallthru
          _
        // Predicated region
        $region33: #{tpu_custom_call.1} parent=23 // pred_check
          %p110 = pneg %p48
        $region34: #{tpu_custom_call.1} parent=23 // pred_check_branch
          %112 = sbr.rel (%p110) target = $region36
        $region35: #{tpu_custom_call.1} parent=23 // pred_region
          %113 = dma.done [#allocation4], 128
        $region36: #{tpu_custom_call.1} parent=23 // pred_fallthru
          _
      $region24: #{tpu_custom_call.1} parent=5 // pred_fallthru
        _
      %p114 = scmp.le.s32.totalorder 2, %s9
      // Predicated region
      $region37: #{tpu_custom_call.1} parent=5 // pred_check
        %p115 = pneg %p114
      $region38: #{tpu_custom_call.1} parent=5 // pred_check_branch
        %117 = sbr.rel (%p115) target = $region40
      $region39: #{tpu_custom_call.1} parent=5 // pred_region
        %s118 = ssub.s32 %s9, 2
      $region40: #{tpu_custom_call.1} parent=5 // pred_fallthru
        _
    $region6: #{tpu_custom_call.1} parent=1 // loop_footer
      %s13 = sadd.s32 1, %s9
    $region7: #{tpu_custom_call.1} parent=1 // loop_footer_branch
      %8 = sbr.rel target = $region3
    $region8: #{tpu_custom_call.1} parent=1 // loop_exit
      _
    %119 = vsyncpa [#allocation3], 1
    %s120 = scalar_lea.sflag [#allocation3], 1
    %121 = vsyncpa %s120, 1
    %122 = vsyncpa [#allocation4], 1
    %s123 = scalar_lea.sflag [#allocation4], 1
    %124 = vsyncpa %s123, 1

// kernel: tpu_custom_call.1
$region0: #{tpu_custom_call.1}
  #allocation0 [shape = 'u32[]', space=smem, size = 0x4, offset = 0x4, fixed_abs, tag = 'smem constant byte address 0x4 - core index']
  #allocation1 [shape = 'u32[144,128]{1,0:T(1,128)}', space=vmem, size = 0x12000, scoped, tag = 'internal scratch']
  %s0 = inlined_call_operand.hbm [shape: f32[8,128], index: 0, kind: input, shape index: {}]
  %s1 = inlined_call_operand.hbm [shape: f32[8,128], index: 1, kind: output, shape index: {}]
  %s2 = sld [smem:[#allocation0]]
  $region18: #{tpu_custom_call.1} parent=0
    _
  %s4 = ssub.s32 1, %s2
  %s5 = scalar_select 0, %s4, %s2
  $region1: #{tpu_custom_call.1} parent=0
    #allocation2 [shape = 'u8[4096]{0}', space=vmem, size = 0x1000, scoped, tag = 'input window, operand 0, single buffered']
    #allocation3 [shape = 's32[1]{0}', space=sflag, size = 0x4, scoped, tag = 'scoped memory for tpu_custom_call.1']
    #allocation4 [shape = 's32[1]{0}', space=sflag, size = 0x4, scoped, tag = 'scoped memory for tpu_custom_call.1']
    #allocation5 [shape = 'u8[4096]{0}', space=vmem, size = 0x1000, scoped, tag = 'output window, operand 0, single buffered']
    %6 = vsyncpa [#allocation3], 0
    %7 = vsyncpa [#allocation4], 0
    // Predicated region
    $region2: #{tpu_custom_call.1} parent=1 // pred_check
      _
    $region3: #{tpu_custom_call.1} parent=1 // pred_check_branch
      %9 = sbr.rel (0) target = $region5
    $region4: #{tpu_custom_call.1} parent=1 // pred_region
      %s11 = ssub.s32 128, 128
      %12 = vsyncadd [#allocation3], %s11
      %s14 = sshll.u32 [#allocation2], 4
      %s15 = int_to_ptr.vmem [resolvable:$true] %s14
      %17 = dma.hbm_to_vmem [thread:$0]  %s0, 128, %s15, [#allocation3]
    $region5: #{tpu_custom_call.1} parent=1 // pred_fallthru
      _
    // Predicated region
    $region6: #{tpu_custom_call.1} parent=1 // pred_check
      _
    $region7: #{tpu_custom_call.1} parent=1 // pred_check_branch
      %19 = sbr.rel (0) target = $region9
    $region8: #{tpu_custom_call.1} parent=1 // pred_region
      %20 = dma.done [#allocation3], 128
    $region9: #{tpu_custom_call.1} parent=1 // pred_fallthru
      _
    %v21 = vld [vmem:[#allocation2] sm:$0xff]
    %v22 = verf.f32.pop %v21
    %23 = vst [vmem:[#allocation5] sm:$0xff] %v22
    // Predicated region
    $region10: #{tpu_custom_call.1} parent=1 // pred_check
      _
    $region11: #{tpu_custom_call.1} parent=1 // pred_check_branch
      %25 = sbr.rel (0) target = $region13
    $region12: #{tpu_custom_call.1} parent=1 // pred_region
      %s27 = ssub.s32 128, 128
      %28 = vsyncadd [#allocation4], %s27
      %s30 = sshll.u32 [#allocation5], 4
      %s31 = int_to_ptr.vmem [resolvable:$true] %s30
      %33 = dma.vmem_to_hbm [thread:$0]  %s31, 128, %s1, [#allocation4]
    $region13: #{tpu_custom_call.1} parent=1 // pred_fallthru
      _
    // Predicated region
    $region14: #{tpu_custom_call.1} parent=1 // pred_check
      _
    $region15: #{tpu_custom_call.1} parent=1 // pred_check_branch
      %35 = sbr.rel (0) target = $region17
    $region16: #{tpu_custom_call.1} parent=1 // pred_region
      %36 = dma.done [#allocation4], 128
    $region17: #{tpu_custom_call.1} parent=1 // pred_fallthru
      _
    %37 = vsyncpa [#allocation3], 1
    %38 = vsyncpa [#allocation4], 1

// kernel: tpu_custom_call.1
$region0: #{tpu_custom_call.1}
  #allocation0 [shape = 'u32[]', space=smem, size = 0x4, offset = 0x4, fixed_abs, tag = 'smem constant byte address 0x4 - core index']
  #allocation1 [shape = 'u32[144,128]{1,0:T(1,128)}', space=vmem, size = 0x12000, scoped, tag = 'internal scratch']
  %s0 = inlined_call_operand.vmem [shape: f32[16,32], index: 0, kind: input, shape index: {}]
  %s1 = inlined_call_operand.hbm [shape: bf16[32,32], index: 1, kind: input, shape index: {}]
  %s2 = inlined_call_operand.hbm [shape: bf16[32,32], index: 2, kind: input, shape index: {}]
  %s3 = inlined_call_operand.vmem [shape: f32[1,32], index: 3, kind: input, shape index: {}]
  %s4 = inlined_call_operand.vmem [shape: f32[1,32], index: 4, kind: input, shape index: {}]
  %s5 = inlined_call_operand.vmem [shape: bf16[32,4], index: 5, kind: input, shape index: {}]
  %s6 = inlined_call_operand.vmem [shape: bf16[4,32], index: 6, kind: input, shape index: {}]
  %s7 = inlined_call_operand.hbm [shape: f32[1,2,32], index: 7, kind: output, shape index: {}]
  %s8 = sld [smem:[#allocation0]]
  $region46: #{tpu_custom_call.1} parent=0
    _
  %s10 = ssub.s32 1, %s8
  %s11 = scalar_select 0, %s10, %s8
  $region1: #{tpu_custom_call.1} parent=0
    #allocation2 [shape = 'u8[8192]{0}', space=vmem, size = 0x2000, scoped, tag = 'input window, operand 1, single buffered']
    #allocation3 [shape = 's32[1]{0}', space=sflag, size = 0x4, scoped, tag = 'scoped memory for tpu_custom_call.1']
    #allocation4 [shape = 's32[1]{0}', space=sflag, size = 0x4, scoped, tag = 'scoped memory for tpu_custom_call.1']
    #allocation5 [shape = 'u8[8192]{0}', space=vmem, size = 0x2000, scoped, tag = 'input window, operand 2, single buffered']
    #allocation6 [shape = 's32[1]{0}', space=sflag, size = 0x4, scoped, tag = 'scoped memory for tpu_custom_call.1']
    #allocation7 [shape = 'u8[1024]{0}', space=vmem, size = 0x400, scoped, tag = 'output window, operand 0, single buffered']
    %12 = vsyncpa [#allocation3], 0
    %13 = vsyncpa [#allocation6], 0
    %14 = vsyncpa [#allocation4], 0
    // Predicated region
    $region2: #{tpu_custom_call.1} parent=1 // pred_check
      _
    $region3: #{tpu_custom_call.1} parent=1 // pred_check_branch
      %16 = sbr.rel (0) target = $region5
    $region4: #{tpu_custom_call.1} parent=1 // pred_region
      _
    $region5: #{tpu_custom_call.1} parent=1 // pred_fallthru
      _
    // Predicated region
    $region6: #{tpu_custom_call.1} parent=1 // pred_check
      _
    $region7: #{tpu_custom_call.1} parent=1 // pred_check_branch
      %18 = sbr.rel (0) target = $region9
    $region8: #{tpu_custom_call.1} parent=1 // pred_region
      %s20 = ssub.s32 256, 256
      %21 = vsyncadd [#allocation3], %s20
      %s22 = sshll.u32 [#allocation2], 4
      %s23 = int_to_ptr.vmem [resolvable:$true] %s22
      %28 = dma.hbm_to_vmem [thread:$0]  %s1, 256, %s23, [#allocation3], 64, 64, 4
    $region9: #{tpu_custom_call.1} parent=1 // pred_fallthru
      _
    // Predicated region
    $region10: #{tpu_custom_call.1} parent=1 // pred_check
      _
    $region11: #{tpu_custom_call.1} parent=1 // pred_check_branch
      %30 = sbr.rel (0) target = $region13
    $region12: #{tpu_custom_call.1} parent=1 // pred_region
      %s32 = ssub.s32 256, 256
      %33 = vsyncadd [#allocation6], %s32
      %s34 = sshll.u32 [#allocation5], 4
      %s35 = int_to_ptr.vmem [resolvable:$true] %s34
      %40 = dma.hbm_to_vmem [thread:$0]  %s2, 256, %s35, [#allocation6], 64, 64, 4
    $region13: #{tpu_custom_call.1} parent=1 // pred_fallthru
      _
    // Predicated region
    $region14: #{tpu_custom_call.1} parent=1 // pred_check
      _
    $region15: #{tpu_custom_call.1} parent=1 // pred_check_branch
      %42 = sbr.rel (0) target = $region17
    $region16: #{tpu_custom_call.1} parent=1 // pred_region
      _
    $region17: #{tpu_custom_call.1} parent=1 // pred_fallthru
      _
    // Predicated region
    $region18: #{tpu_custom_call.1} parent=1 // pred_check
      _
    $region19: #{tpu_custom_call.1} parent=1 // pred_check_branch
      %44 = sbr.rel (0) target = $region21
    $region20: #{tpu_custom_call.1} parent=1 // pred_region
      _
    $region21: #{tpu_custom_call.1} parent=1 // pred_fallthru
      _
    // Predicated region
    $region22: #{tpu_custom_call.1} parent=1 // pred_check
      _
    $region23: #{tpu_custom_call.1} parent=1 // pred_check_branch
      %46 = sbr.rel (0) target = $region25
    $region24: #{tpu_custom_call.1} parent=1 // pred_region
      _
    $region25: #{tpu_custom_call.1} parent=1 // pred_fallthru
      _
    // Predicated region
    $region26: #{tpu_custom_call.1} parent=1 // pred_check
      _
    $region27: #{tpu_custom_call.1} parent=1 // pred_check_branch
      %48 = sbr.rel (0) target = $region29
    $region28: #{tpu_custom_call.1} parent=1 // pred_region
      _
    $region29: #{tpu_custom_call.1} parent=1 // pred_fallthru
      _
    // Predicated region
    $region30: #{tpu_custom_call.1} parent=1 // pred_check
      _
    $region31: #{tpu_custom_call.1} parent=1 // pred_check_branch
      %50 = sbr.rel (0) target = $region33
    $region32: #{tpu_custom_call.1} parent=1 // pred_region
      %51 = dma.done [#allocation3], 256
    $region33: #{tpu_custom_call.1} parent=1 // pred_fallthru
      _
    // Predicated region
    $region34: #{tpu_custom_call.1} parent=1 // pred_check
      _
    $region35: #{tpu_custom_call.1} parent=1 // pred_check_branch
      %53 = sbr.rel (0) target = $region37
    $region36: #{tpu_custom_call.1} parent=1 // pred_region
      %54 = dma.done [#allocation6], 256
    $region37: #{tpu_custom_call.1} parent=1 // pred_fallthru
      _
    %v56 = vld [vmem:[%s0] sm:$0xff]
    %v57 = vld [vmem:[%s0 + $0x8] sm:$0xff]
    %v58 = vpack.c.bf16 %v57, %v56
    %v59 = vld [vmem:[#allocation2] sm:$0xf]
    %v60 = vld [vmem:[#allocation2 + $0x4] sm:$0xf]
    %v61 = vld [vmem:[#allocation2 + $0x8] sm:$0xf]
    %v62 = vld [vmem:[#allocation2 + $0xc] sm:$0xf]
    %v63 = vld [vmem:[%s3] sm:$0x1]
    %v65 = vlaneseq
    %v66 = vshrl.u32 %v65, 7
    %v67 = vsub.s32 0, %v66
    %v68 = vrot.slane %v63, %v67
    %v74 = vunpack.c.l.b16 %v59
    %v75 = vunpack.c.l.b16 %v60
    %v76 = vunpack.c.l.b16 %v61
    %v77 = vunpack.c.l.b16 %v62
    %v78 = vpack.c.b16 %v75, %v74
    %v79 = vpack.c.b16 %v77, %v76
    %vm82 = vcmask 261120
    %v84 = vsel %vm82, %v58, 0
    %86 = vmatprep.subr.bf16.mxu0 0
    %87 = vmatpush1.bf16.msra.mxu0 0
    %88 = vmatprep.subr.bf16.mxu0 0
    %89 = vmatpush1.bf16.msra.mxu0 0
    %90 = vmatprep.subr.bf16.mxu0 0
    %91 = vmatpush1.bf16.msra.mxu0 0
    %92 = vmatprep.subr.bf16.mxu0 0
    %93 = vmatpush1.bf16.msra.mxu0 0
    %94 = vmatprep.subr.bf16.mxu0 0
    %95 = vmatpush1.bf16.msra.mxu0 0
    %96 = vmatprep.subr.bf16.mxu0 0
    %97 = vmatpush1.bf16.msra.mxu0 0
    %98 = vmatprep.subr.bf16.mxu0 0
    %99 = vmatpush1.bf16.msra.mxu0 %v79
    %100 = vmatprep.subr.bf16.mxu0 0
    %101 = vmatpush1.bf16.msra.mxu0 %v78
    %102 = vmatprep.subr.bf16.mxu0 0
    %103 = vmatpush2.bf16.msra.mxu0 0
    %104 = vmatprep.subr.bf16.mxu0 0
    %105 = vmatpush2.bf16.msra.mxu0 0
    %106 = vmatprep.subr.bf16.mxu0 0
    %107 = vmatpush2.bf16.msra.mxu0 0
    %108 = vmatprep.subr.bf16.mxu0 0
    %109 = vmatpush2.bf16.msra.mxu0 0
    %110 = vmatprep.subr.bf16.mxu0 0
    %111 = vmatpush2.bf16.msra.mxu0 0
    %112 = vmatprep.subr.bf16.mxu0 0
    %113 = vmatpush2.bf16.msra.mxu0 0
    %114 = vmatprep.subr.bf16.mxu0 0
    %115 = vmatpush2.bf16.msra.mxu0 0
    %116 = vmatprep.subr.bf16.mxu0 0
    %117 = vmatpush2.bf16.msra.mxu0 0
    %118 = vmatprep.mubr.bf16.mxu0 0
    %119 = vmatmul.mubr.bf16.gmra.mxu0 %v84
    %v120 = vpop.f32.mrf.mxu0
    %v121 = vadd.f32 %v68, %v120
    %v122 = vpop.f32.mrf.mxu0
    %v123 = vpop.f32.mrf.mxu0
    %v124 = vadd.f32 %v68, %v123
    %v125 = vpop.f32.mrf.mxu0
    %126 = vdwg.mxu0
    %v127 = vld [vmem:[#allocation5] sm:$0xf]
    %v128 = vld [vmem:[#allocation5 + $0x4] sm:$0xf]
    %v129 = vld [vmem:[#allocation5 + $0x8] sm:$0xf]
    %v130 = vld [vmem:[#allocation5 + $0xc] sm:$0xf]
    %v131 = vld [vmem:[%s4] sm:$0x1]
    %v133 = vlaneseq
    %v134 = vshrl.u32 %v133, 7
    %v135 = vsub.s32 0, %v134
    %v136 = vrot.slane %v131, %v135
    %v142 = vunpack.c.l.b16 %v127
    %v143 = vunpack.c.l.b16 %v128
    %v144 = vunpack.c.l.b16 %v129
    %v145 = vunpack.c.l.b16 %v130
    %v146 = vpack.c.b16 %v143, %v142
    %v147 = vpack.c.b16 %v145, %v144
    %150 = vmatprep.subr.bf16.mxu0 0
    %151 = vmatpush1.bf16.msra.mxu0 0
    %152 = vmatprep.subr.bf16.mxu0 0
    %153 = vmatpush1.bf16.msra.mxu0 0
    %154 = vmatprep.subr.bf16.mxu0 0
    %155 = vmatpush1.bf16.msra.mxu0 0
    %156 = vmatprep.subr.bf16.mxu0 0
    %157 = vmatpush1.bf16.msra.mxu0 0
    %158 = vmatprep.subr.bf16.mxu0 0
    %159 = vmatpush1.bf16.msra.mxu0 0
    %160 = vmatprep.subr.bf16.mxu0 0
    %161 = vmatpush1.bf16.msra.mxu0 0
    %162 = vmatprep.subr.bf16.mxu0 0
    %163 = vmatpush1.bf16.msra.mxu0 %v147
    %164 = vmatprep.subr.bf16.mxu0 0
    %165 = vmatpush1.bf16.msra.mxu0 %v146
    %166 = vmatprep.subr.bf16.mxu0 0
    %167 = vmatpush2.bf16.msra.mxu0 0
    %168 = vmatprep.subr.bf16.mxu0 0
    %169 = vmatpush2.bf16.msra.mxu0 0
    %170 = vmatprep.subr.bf16.mxu0 0
    %171 = vmatpush2.bf16.msra.mxu0 0
    %172 = vmatprep.subr.bf16.mxu0 0
    %173 = vmatpush2.bf16.msra.mxu0 0
    %174 = vmatprep.subr.bf16.mxu0 0
    %175 = vmatpush2.bf16.msra.mxu0 0
    %176 = vmatprep.subr.bf16.mxu0 0
    %177 = vmatpush2.bf16.msra.mxu0 0
    %178 = vmatprep.subr.bf16.mxu0 0
    %179 = vmatpush2.bf16.msra.mxu0 0
    %180 = vmatprep.subr.bf16.mxu0 0
    %181 = vmatpush2.bf16.msra.mxu0 0
    %182 = vmatprep.mubr.bf16.mxu0 0
    %183 = vmatmul.mubr.bf16.gmra.mxu0 %v84
    %v184 = vpop.f32.mrf.mxu0
    %v185 = vadd.f32 %v136, %v184
    %v186 = vpop.f32.mrf.mxu0
    %v187 = vpop.f32.mrf.mxu0
    %v188 = vadd.f32 %v136, %v187
    %v189 = vpop.f32.mrf.mxu0
    %190 = vdwg.mxu0
    %v191 = vpack.c.bf16 %v124, %v121
    %v192 = vld [vmem:[%s5] sm:$0xf]
    %v193 = vld [vmem:[%s5 + $0x4] sm:$0xf]
    %v194 = vld [vmem:[%s5 + $0x8] sm:$0xf]
    %v195 = vld [vmem:[%s5 + $0xc] sm:$0xf]
    %v200 = vunpack.c.l.b16 %v192
    %v201 = vunpack.c.l.b16 %v193
    %v202 = vunpack.c.l.b16 %v194
    %v203 = vunpack.c.l.b16 %v195
    %v204 = vpack.c.b16 %v201, %v200
    %v205 = vpack.c.b16 %v203, %v202
    %v209 = vsel %vm82, %v191, 0
    %211 = vmatprep.subr.bf16.mxu0 0
    %212 = vmatpush1.bf16.msra.mxu0 0
    %213 = vmatprep.subr.bf16.mxu0 0
    %214 = vmatpush1.bf16.msra.mxu0 0
    %215 = vmatprep.subr.bf16.mxu0 0
    %216 = vmatpush1.bf16.msra.mxu0 0
    %217 = vmatprep.subr.bf16.mxu0 0
    %218 = vmatpush1.bf16.msra.mxu0 0
    %219 = vmatprep.subr.bf16.mxu0 0
    %220 = vmatpush1.bf16.msra.mxu0 0
    %221 = vmatprep.subr.bf16.mxu0 0
    %222 = vmatpush1.bf16.msra.mxu0 0
    %223 = vmatprep.subr.bf16.mxu0 0
    %224 = vmatpush1.bf16.msra.mxu0 %v205
    %225 = vmatprep.subr.bf16.mxu0 0
    %226 = vmatpush1.bf16.msra.mxu0 %v204
    %227 = vmatprep.subr.bf16.mxu0 0
    %228 = vmatpush2.bf16.msra.mxu0 0
    %229 = vmatprep.subr.bf16.mxu0 0
    %230 = vmatpush2.bf16.msra.mxu0 0
    %231 = vmatprep.subr.bf16.mxu0 0
    %232 = vmatpush2.bf16.msra.mxu0 0
    %233 = vmatprep.subr.bf16.mxu0 0
    %234 = vmatpush2.bf16.msra.mxu0 0
    %235 = vmatprep.subr.bf16.mxu0 0
    %236 = vmatpush2.bf16.msra.mxu0 0
    %237 = vmatprep.subr.bf16.mxu0 0
    %238 = vmatpush2.bf16.msra.mxu0 0
    %239 = vmatprep.subr.bf16.mxu0 0
    %240 = vmatpush2.bf16.msra.mxu0 0
    %241 = vmatprep.subr.bf16.mxu0 0
    %242 = vmatpush2.bf16.msra.mxu0 0
    %243 = vmatprep.mubr.bf16.mxu0 0
    %244 = vmatmul.mubr.bf16.gmra.mxu0 %v209
    %v245 = vpop.f32.mrf.mxu0
    %v246 = vadd.f32 0.0, %v245
    %v247 = vpop.f32.mrf.mxu0
    %v248 = vpop.f32.mrf.mxu0
    %v249 = vadd.f32 0.0, %v248
    %v250 = vpop.f32.mrf.mxu0
    %251 = vdwg.mxu0
    %vm252 = vcmask 31744
    %v253 = vsel %vm252, %v246, -inf
    %v254 = vrot.slane %v253, 4
    %v255 = vmax.f32 %v253, %v254
    %v256 = vrot.slane %v255, 2
    %v257 = vmax.f32 %v255, %v256
    %v258 = vrot.slane %v257, 1
    %v259 = vmax.f32 %v257, %v258
    %v260 = vsub.f32 %v246, %v259
    %v261 = vmul.f32 %v260, 1.442695
    %v262 = vpow.pop %v261
    %v263 = vsel %vm252, %v262, 0.0
    %v264 = vrot.slane %v263, 4
    %v265 = vadd.f32 %v263, %v264
    %v266 = vrot.slane %v265, 2
    %v267 = vadd.f32 %v265, %v266
    %v268 = vrot.slane %v267, 1
    %v269 = vadd.f32 %v267, %v268
    %v270 = vrcp.pop %v269
    %v271 = vmul.f32 %v262, %v270
    %v272 = vpack.c.bf16 %v271, %v271
    %v273 = vld [vmem:[%s6] sm:$0x3]
    %v275 = vsel %vm252, %v272, 0
    %vm277 = vcmask 1041408
    %v279 = vsel %vm277, %v273, 0
    %281 = vmatprep.subr.bf16.mxu0 0
    %282 = vmatpush1.bf16.msra.mxu0 0
    %283 = vmatprep.subr.bf16.mxu0 0
    %284 = vmatpush1.bf16.msra.mxu0 0
    %285 = vmatprep.subr.bf16.mxu0 0
    %286 = vmatpush1.bf16.msra.mxu0 0
    %287 = vmatprep.subr.bf16.mxu0 0
    %288 = vmatpush1.bf16.msra.mxu0 0
    %289 = vmatprep.subr.bf16.mxu0 0
    %290 = vmatpush1.bf16.msra.mxu0 0
    %291 = vmatprep.subr.bf16.mxu0 0
    %292 = vmatpush1.bf16.msra.mxu0 0
    %293 = vmatprep.subr.bf16.mxu0 0
    %294 = vmatpush1.bf16.msra.mxu0 0
    %295 = vmatprep.subr.bf16.mxu0 0
    %296 = vmatpush1.bf16.msra.mxu0 %v279
    %297 = vmatprep.subr.bf16.mxu0 0
    %298 = vmatpush2.bf16.msra.mxu0 0
    %299 = vmatprep.subr.bf16.mxu0 0
    %300 = vmatpush2.bf16.msra.mxu0 0
    %301 = vmatprep.subr.bf16.mxu0 0
    %302 = vmatpush2.bf16.msra.mxu0 0
    %303 = vmatprep.subr.bf16.mxu0 0
    %304 = vmatpush2.bf16.msra.mxu0 0
    %305 = vmatprep.subr.bf16.mxu0 0
    %306 = vmatpush2.bf16.msra.mxu0 0
    %307 = vmatprep.subr.bf16.mxu0 0
    %308 = vmatpush2.bf16.msra.mxu0 0
    %309 = vmatprep.subr.bf16.mxu0 0
    %310 = vmatpush2.bf16.msra.mxu0 0
    %311 = vmatprep.subr.bf16.mxu0 0
    %312 = vmatpush2.bf16.msra.mxu0 0
    %313 = vmatprep.mubr.bf16.mxu0 0
    %314 = vmatmul.mubr.bf16.gmra.mxu0 %v275
    %v315 = vpop.f32.mrf.mxu0
    %v316 = vadd.f32 0.0, %v315
    %v317 = vpop.f32.mrf.mxu0
    %v318 = vpop.f32.mrf.mxu0
    %v319 = vpop.f32.mrf.mxu0
    %320 = vdwg.mxu0
    %v321 = vmul.f32 %v316, %v185
    %v322 = vsel %vm82, %v321, 0.0
    %v323 = vrot.slane %v322, 4
    %v324 = vadd.f32 %v322, %v323
    %v325 = vrot.slane %v324, 2
    %v326 = vadd.f32 %v324, %v325
    %v327 = vrot.slane %v326, 1
    %v328 = vadd.f32 %v326, %v327
    %vm329 = vcmask 253952
    %330 = vst.msk [vmem:[#allocation7] sm:$0x1] %vm329, %v328
    %v331 = vsel %vm252, %v249, -inf
    %v332 = vrot.slane %v331, 4
    %v333 = vmax.f32 %v331, %v332
    %v334 = vrot.slane %v333, 2
    %v335 = vmax.f32 %v333, %v334
    %v336 = vrot.slane %v335, 1
    %v337 = vmax.f32 %v335, %v336
    %v338 = vsub.f32 %v249, %v337
    %v339 = vmul.f32 %v338, 1.442695
    %v340 = vpow.pop %v339
    %v341 = vsel %vm252, %v340, 0.0
    %v342 = vrot.slane %v341, 4
    %v343 = vadd.f32 %v341, %v342
    %v344 = vrot.slane %v343, 2
    %v345 = vadd.f32 %v343, %v344
    %v346 = vrot.slane %v345, 1
    %v347 = vadd.f32 %v345, %v346
    %v348 = vrcp.pop %v347
    %v349 = vmul.f32 %v340, %v348
    %v350 = vpack.c.bf16 %v349, %v349
    %v351 = vld [vmem:[%s6] sm:$0x3]
    %v353 = vsel %vm252, %v350, 0
    %v356 = vsel %vm277, %v351, 0
    %358 = vmatprep.subr.bf16.mxu0 0
    %359 = vmatpush1.bf16.msra.mxu0 0
    %360 = vmatprep.subr.bf16.mxu0 0
    %361 = vmatpush1.bf16.msra.mxu0 0
    %362 = vmatprep.subr.bf16.mxu0 0
    %363 = vmatpush1.bf16.msra.mxu0 0
    %364 = vmatprep.subr.bf16.mxu0 0
    %365 = vmatpush1.bf16.msra.mxu0 0
    %366 = vmatprep.subr.bf16.mxu0 0
    %367 = vmatpush1.bf16.msra.mxu0 0
    %368 = vmatprep.subr.bf16.mxu0 0
    %369 = vmatpush1.bf16.msra.mxu0 0
    %370 = vmatprep.subr.bf16.mxu0 0
    %371 = vmatpush1.bf16.msra.mxu0 0
    %372 = vmatprep.subr.bf16.mxu0 0
    %373 = vmatpush1.bf16.msra.mxu0 %v356
    %374 = vmatprep.subr.bf16.mxu0 0
    %375 = vmatpush2.bf16.msra.mxu0 0
    %376 = vmatprep.subr.bf16.mxu0 0
    %377 = vmatpush2.bf16.msra.mxu0 0
    %378 = vmatprep.subr.bf16.mxu0 0
    %379 = vmatpush2.bf16.msra.mxu0 0
    %380 = vmatprep.subr.bf16.mxu0 0
    %381 = vmatpush2.bf16.msra.mxu0 0
    %382 = vmatprep.subr.bf16.mxu0 0
    %383 = vmatpush2.bf16.msra.mxu0 0
    %384 = vmatprep.subr.bf16.mxu0 0
    %385 = vmatpush2.bf16.msra.mxu0 0
    %386 = vmatprep.subr.bf16.mxu0 0
    %387 = vmatpush2.bf16.msra.mxu0 0
    %388 = vmatprep.subr.bf16.mxu0 0
    %389 = vmatpush2.bf16.msra.mxu0 0
    %390 = vmatprep.mubr.bf16.mxu0 0
    %391 = vmatmul.mubr.bf16.gmra.mxu0 %v353
    %v392 = vpop.f32.mrf.mxu0
    %v393 = vadd.f32 0.0, %v392
    %v394 = vpop.f32.mrf.mxu0
    %v395 = vpop.f32.mrf.mxu0
    %v396 = vpop.f32.mrf.mxu0
    %397 = vdwg.mxu0
    %v398 = vmul.f32 %v393, %v188
    %v399 = vsel %vm82, %v398, 0.0
    %v400 = vrot.slane %v399, 4
    %v401 = vadd.f32 %v399, %v400
    %v402 = vrot.slane %v401, 2
    %v403 = vadd.f32 %v401, %v402
    %v404 = vrot.slane %v403, 1
    %v405 = vadd.f32 %v403, %v404
    %406 = vst.msk [vmem:[#allocation7 + $0x1] sm:$0x1] %vm329, %v405
    // Predicated region
    $region38: #{tpu_custom_call.1} parent=1 // pred_check
      _
    $region39: #{tpu_custom_call.1} parent=1 // pred_check_branch
      %408 = sbr.rel (0) target = $region41
    $region40: #{tpu_custom_call.1} parent=1 // pred_region
      %s410 = ssub.s32 32, 32
      %411 = vsyncadd [#allocation4], %s410
      %s413 = sshll.u32 [#allocation7], 4
      %s414 = int_to_ptr.vmem [resolvable:$true] %s413
      %416 = dma.vmem_to_hbm [thread:$0]  %s414, 32, %s7, [#allocation4]
    $region41: #{tpu_custom_call.1} parent=1 // pred_fallthru
      _
    // Predicated region
    $region42: #{tpu_custom_call.1} parent=1 // pred_check
      _
    $region43: #{tpu_custom_call.1} parent=1 // pred_check_branch
      %418 = sbr.rel (0) target = $region45
    $region44: #{tpu_custom_call.1} parent=1 // pred_region
      %419 = dma.done [#allocation4], 32
    $region45: #{tpu_custom_call.1} parent=1 // pred_fallthru
      _
    %420 = vsyncpa [#allocation3], 1
    %421 = vsyncpa [#allocation6], 1
    %422 = vsyncpa [#allocation4], 1

</llo_original>
